<compile_context>
chip_gen: v7x
topology: tpu7x:2x2x1
jax: 0.10.0
libtpu: 0.0.40
codegen_flags: <defaults>
</compile_context>

<pallas_src>
import functools

import jax
import jax.numpy as jnp
from jax.experimental import pallas as pl
from jax.experimental.pallas import tpu as pltpu

_EPS = 1e-5


def _round_up(v, m):
    return (v + m - 1) // m * m


def _pad_to(x, shape):
    pads = [(0, s - d) for s, d in zip(shape, x.shape)]
    return jnp.pad(x, pads)


# ---------------------------------------------------------------------------
# Fused Pallas kernel: grid = (hidden_layer, node_row_tile)
# ---------------------------------------------------------------------------
def _sgcnet_kernel(a_ref, x_ref, w_ref, b_ref, wo_ref, bo_ref, o_ref, h_ref,
                   *, tm):
    l = pl.program_id(0)            # layer axis (outer, strictly sequential)
    i = pl.program_id(1)            # node-row tile axis
    n_layers = pl.num_programs(0)

    write_slot = l & 1
    read_slot = (l + 1) & 1         # slot written by the previous layer
    is_last = l == n_layers - 1
    not_last = l < n_layers - 1

    # Seed the ping-pong activation buffer with the padded bf16 inputs once.
    @pl.when((l == 0) & (i == 0))
    def _():
        h_ref[1] = x_ref[...]

    # SGC aggregation for this row tile: (tm, Npad) @ (Npad, Fpad), f32 acc.
    agg = jnp.dot(a_ref[...], h_ref[read_slot],
                  preferred_element_type=jnp.float32)

    # Hidden Linear with eval-mode BatchNorm folded in; epilogue in f32.
    y = jnp.dot(agg.astype(jnp.bfloat16), w_ref[...],
                preferred_element_type=jnp.float32) + b_ref[...]
    h_new = y.astype(jnp.bfloat16)      # dropout == identity in eval mode

    # Store this tile of the new activations into the write slot, but only if
    # a following layer will consume them (skip the dead store on the last).
    row0 = pl.multiple_of(i * tm, tm)

    @pl.when(not_last & (write_slot == 0))
    def _():
        h_ref[0, pl.ds(row0, tm), :] = h_new

    @pl.when(not_last & (write_slot == 1))
    def _():
        h_ref[1, pl.ds(row0, tm), :] = h_new

    # Final classifier projection only on the last layer.  The output block
    # (i, 0) is revisited once per layer; intermediate flushes hold garbage
    # and are overwritten by this last-layer write in grid order.
    @pl.when(is_last)
    def _():
        o_ref[...] = (jnp.dot(h_new, wo_ref[...],
                              preferred_element_type=jnp.float32)
                      + bo_ref[...]).astype(o_ref.dtype)


# ---------------------------------------------------------------------------
# Wrapper: BN folding, lane padding, bf16 casts, pallas_call
# ---------------------------------------------------------------------------
def sgcnet_forward(params, x, a_hat):
    linears = params["linears"]
    bns = params["bns"]
    num_layers = len(linears)
    assert num_layers >= 2, "fused kernel expects >= 1 aggregation layer"

    n, input_dim = x.shape
    hidden_dim = linears[0][0].shape[1]
    output_dim = linears[-1][0].shape[1]
    n_agg = num_layers - 1

    # Lane padding (feature dims -> multiples of 128) and node-row tiling.
    f_pad = _round_up(max(input_dim, hidden_dim), 128)
    o_pad = _round_up(output_dim, 128)
    tm = 256
    n_pad = _round_up(n, tm) if n > tm else _round_up(n, 128)
    tm = min(tm, n_pad)
    n_tiles = n_pad // tm

    # Fold eval-mode BatchNorm into the hidden linears and stack per layer.
    ws = jnp.zeros((n_agg, f_pad, f_pad), jnp.float32)
    bs = jnp.zeros((n_agg, 1, f_pad), jnp.float32)
    for li in range(n_agg):
        w, b = linears[li]                    # (din, dout), (dout,)
        gamma, beta, mu, var = bns[li]        # each (dout,)
        s = gamma * jax.lax.rsqrt(var + _EPS)
        ws = ws.at[li, : w.shape[0], : w.shape[1]].set(w * s[None, :])
        bs = bs.at[li, 0, : b.shape[0]].set((b - mu) * s + beta)
    ws = ws.astype(jnp.bfloat16)

    w_last, b_last = linears[-1]
    wo = _pad_to(w_last, (f_pad, o_pad)).astype(jnp.bfloat16)
    bo = _pad_to(b_last[None, :], (1, o_pad)).astype(jnp.float32)

    a_p = _pad_to(a_hat, (n_pad, n_pad)).astype(jnp.bfloat16)
    x_p = _pad_to(x, (n_pad, f_pad)).astype(jnp.bfloat16)

    out = pl.pallas_call(
        functools.partial(_sgcnet_kernel, tm=tm),
        out_shape=jax.ShapeDtypeStruct((n_pad, o_pad), jnp.float32),
        grid_spec=pltpu.PrefetchScalarGridSpec(
            num_scalar_prefetch=0,
            grid=(n_agg, n_tiles),
            in_specs=[
                # A_hat row tile, streamed per row tile (resident when n_tiles==1).
                pl.BlockSpec((tm, n_pad), lambda l, i: (i, 0)),
                # Input features, resident across the whole call.
                pl.BlockSpec((n_pad, f_pad), lambda l, i: (0, 0)),
                # Per-layer folded (W, b) — fetched only when the layer changes.
                pl.BlockSpec((None, f_pad, f_pad), lambda l, i: (l, 0, 0)),
                pl.BlockSpec((None, 1, f_pad), lambda l, i: (l, 0, 0)),
                # Final classifier weight / bias, resident.
                pl.BlockSpec((f_pad, o_pad), lambda l, i: (0, 0)),
                pl.BlockSpec((1, o_pad), lambda l, i: (0, 0)),
            ],
            out_specs=pl.BlockSpec((tm, o_pad), lambda l, i: (i, 0)),
            # Ping-pong full-graph activation buffer (bf16, 128 lanes).
            scratch_shapes=[pltpu.VMEM((2, n_pad, f_pad), jnp.bfloat16)],
        ),
        compiler_params=pltpu.CompilerParams(
            # Both axes must be sequential: layer l reads every row tile that
            # layer l-1 wrote into the (single-core) VMEM scratch.
            # TODO(synk): a "parallel" row axis (v7x 2-TC sharding) would need
            # per-layer pallas_calls instead of the fused scratch-resident form.
            dimension_semantics=("arbitrary", "arbitrary"),
            vmem_limit_bytes=48 * 1024 * 1024,   # safe on v7x (64 MiB physical)
        ),
    )(a_p, x_p, ws, bs, wo, bo)

    return out[:n, :output_dim]


# ---------------------------------------------------------------------------
# Glue: normalized adjacency + parameter init + pure-JAX reference
# ---------------------------------------------------------------------------
def build_norm_adj(edge_index, num_nodes, dtype=jnp.float32):
    """Dense adjacency matching the spec's SGConv.propagate (no self-loops)."""
    row, col = edge_index[0], edge_index[1]
    deg = jnp.zeros((num_nodes,), dtype).at[row].add(1.0)
    deg_inv_sqrt = jnp.where(deg > 0, deg ** -0.5, 0.0)      # inf -> 0
    norm = deg_inv_sqrt[row] * deg_inv_sqrt[col]
    # message x_j = x[row], 'add'-aggregated at target col  =>  A[col, row]
    return jnp.zeros((num_nodes, num_nodes), dtype).at[col, row].add(norm)


def init_sgcnet_params(key, input_dim, hidden_dim, output_dim, num_layers):
    dims = [input_dim] + [hidden_dim] * (num_layers - 1) + [output_dim]
    params = {"linears": [], "bns": []}
    for i in range(num_layers):
        din, dout = dims[i], dims[i + 1]
        key, kw, kb = jax.random.split(key, 3)
        bound = 1.0 / float(din) ** 0.5
        # stored pre-transposed: (din, dout) so kernels compute x @ W
        w = jax.random.uniform(kw, (din, dout), jnp.float32, -bound, bound)
        b = jax.random.uniform(kb, (dout,), jnp.float32, -bound, bound)
        params["linears"].append((w, b))
        if i < num_layers - 1:
            params["bns"].append(
                (jnp.ones((dout,), jnp.float32),     # gamma
                 jnp.zeros((dout,), jnp.float32),    # beta
                 jnp.zeros((dout,), jnp.float32),    # running_mean
                 jnp.ones((dout,), jnp.float32)))    # running_var
    return params


def reference_forward(params, x, a_hat):
    """Plain-JAX f32 eval-mode forward (explicit BN, no folding/padding)."""
    h = x
    for i in range(len(params["linears"]) - 1):
        w, b = params["linears"][i]
        gamma, beta, mu, var = params["bns"][i]
        h = a_hat @ h
        h = h @ w + b
        h = (h - mu) * jax.lax.rsqrt(var + _EPS) * gamma + beta
    w, b = params["linears"][-1]
    return h @ w + b


# ---------------------------------------------------------------------------
if __name__ == "__main__":
    key = jax.random.PRNGKey(0)

    num_nodes, num_edges = 64, 256
    input_dim, hidden_dim, output_dim, num_layers = 16, 32, 8, 3

    key, k_x, k_src, k_dst, k_p = jax.random.split(key, 5)
    x = jax.random.normal(k_x, (num_nodes, input_dim), jnp.float32)
    src = jax.random.randint(k_src, (num_edges,), 0, num_nodes)
    dst = jax.random.randint(k_dst, (num_edges,), 0, num_nodes)
    edge_index = jnp.stack([src, dst], axis=0)            # (2, E)

    a_hat = build_norm_adj(edge_index, num_nodes)
    params = init_sgcnet_params(k_p, input_dim, hidden_dim, output_dim,
                                num_layers)

    out = sgcnet_forward(params, x, a_hat)
    out = jax.block_until_ready(out)
    assert out.shape == (num_nodes, output_dim)

    ref = reference_forward(params, x, a_hat)
    err = float(jnp.max(jnp.abs(out - ref)))
    assert err < 5e-2, f"max abs err vs reference: {err}"

    print("KERNEL_OK")
</pallas_src>

<mosaic_0001>
module attributes {stable_mosaic.version = 11 : i64} {
  func.func @_sgcnet_kernel(%arg0: i32, %arg1: i32, %arg2: memref<128x128xbf16, #tpu.memory_space<vmem>>, %arg3: memref<128x128xbf16, #tpu.memory_space<vmem>>, %arg4: memref<1x128x128xbf16, #tpu.memory_space<vmem>>, %arg5: memref<1x1x128xf32, #tpu.memory_space<vmem>>, %arg6: memref<128x128xbf16, #tpu.memory_space<vmem>>, %arg7: memref<1x128xf32, #tpu.memory_space<vmem>>, %arg8: memref<128x128xf32, #tpu.memory_space<vmem>>, %arg9: memref<2x128x128xbf16, #tpu.memory_space<vmem>>) attributes {dimension_semantics = [#tpu.dimension_semantics<arbitrary>, #tpu.dimension_semantics<arbitrary>], iteration_bounds = array<i64: 2, 1>, scalar_prefetch = 0 : i64, scratch_operands = 1 : i64, tpu.core_type = #tpu.core_type<tc>, window_params = [{transform_indices = @transform_0, window_bounds = array<i64: 128, 128>}, {pipeline_mode = #tpu.pipeline_mode<synchronous>, transform_indices = @transform_1, window_bounds = array<i64: 128, 128>}, {transform_indices = @transform_2, window_bounds = array<i64: 1, 128, 128>}, {transform_indices = @transform_3, window_bounds = array<i64: 1, 1, 128>}, {pipeline_mode = #tpu.pipeline_mode<synchronous>, transform_indices = @transform_4, window_bounds = array<i64: 128, 128>}, {pipeline_mode = #tpu.pipeline_mode<synchronous>, transform_indices = @transform_5, window_bounds = array<i64: 1, 128>}, {transform_indices = @transform_6, window_bounds = array<i64: 128, 128>}]} {
    %c1_i32 = arith.constant 1 : i32
    %0 = arith.andi %arg0, %c1_i32 : i32
    %c1_i32_0 = arith.constant 1 : i32
    %1 = arith.addi %arg0, %c1_i32_0 : i32
    %c1_i32_1 = arith.constant 1 : i32
    %2 = arith.andi %1, %c1_i32_1 : i32
    %c1_i32_2 = arith.constant 1 : i32
    %3 = arith.cmpi eq, %arg0, %c1_i32_2 : i32
    %c1_i32_3 = arith.constant 1 : i32
    %4 = arith.cmpi slt, %arg0, %c1_i32_3 : i32
    %c0_i32 = arith.constant 0 : i32
    %5 = arith.cmpi eq, %arg0, %c0_i32 : i32
    %c0_i32_4 = arith.constant 0 : i32
    %6 = arith.cmpi eq, %arg1, %c0_i32_4 : i32
    %7 = arith.andi %5, %6 : i1
    %8 = arith.extui %7 : i1 to i32
    %c0_i32_5 = arith.constant 0 : i32
    %9 = arith.cmpi ne, %8, %c0_i32_5 : i32
    scf.if %9 {
      %c0_21 = arith.constant 0 : index
      %c0_22 = arith.constant 0 : index
      %36 = vector.load %arg3[%c0_21, %c0_22] : memref<128x128xbf16, #tpu.memory_space<vmem>>, vector<128x128xbf16>
      %c1 = arith.constant 1 : index
      %c0_23 = arith.constant 0 : index
      %c0_24 = arith.constant 0 : index
      %37 = vector.load %arg9[%c1, %c0_23, %c0_24] : memref<2x128x128xbf16, #tpu.memory_space<vmem>>, vector<1x128x128xbf16>
      %38 = vector.shape_cast %37 : vector<1x128x128xbf16> to vector<128x128xbf16>
      %39 = vector.shape_cast %36 : vector<128x128xbf16> to vector<1x128x128xbf16>
      tpu.vector_store %arg9[%c1, %c0_23, %c0_24], %39 {strides = array<i32>} : memref<2x128x128xbf16, #tpu.memory_space<vmem>>, vector<1x128x128xbf16>,
    } else {
    }
    %c0 = arith.constant 0 : index
    %c0_6 = arith.constant 0 : index
    %10 = vector.load %arg2[%c0, %c0_6] : memref<128x128xbf16, #tpu.memory_space<vmem>>, vector<128x128xbf16>
    %11 = arith.index_cast %2 : i32 to index
    %c0_7 = arith.constant 0 : index
    %c0_8 = arith.constant 0 : index
    %12 = vector.load %arg9[%11, %c0_7, %c0_8] : memref<2x128x128xbf16, #tpu.memory_space<vmem>>, vector<1x128x128xbf16>
    %13 = vector.shape_cast %12 : vector<1x128x128xbf16> to vector<128x128xbf16>
    %cst = arith.constant dense<0.000000e+00> : vector<128x128xf32>
    %14 = tpu.matmul %10, %13, %cst {dimension_numbers = #tpu.dot_dimension_numbers<[1], [0], [0], [1], [0, 0, 1, 1], [], []>} : vector<128x128xbf16>, vector<128x128xbf16>, vector<128x128xf32> -> vector<128x128xf32>
    %15 = arith.truncf %14 : vector<128x128xf32> to vector<128x128xbf16>
    %c0_9 = arith.constant 0 : index
    %c0_10 = arith.constant 0 : index
    %c0_11 = arith.constant 0 : index
    %16 = vector.load %arg4[%c0_9, %c0_10, %c0_11] : memref<1x128x128xbf16, #tpu.memory_space<vmem>>, vector<1x128x128xbf16>
    %17 = vector.shape_cast %16 : vector<1x128x128xbf16> to vector<128x128xbf16>
    %cst_12 = arith.constant dense<0.000000e+00> : vector<128x128xf32>
    %18 = tpu.matmul %15, %17, %cst_12 {dimension_numbers = #tpu.dot_dimension_numbers<[1], [0], [0], [1], [0, 0, 1, 1], [], []>} : vector<128x128xbf16>, vector<128x128xbf16>, vector<128x128xf32> -> vector<128x128xf32>
    %c0_13 = arith.constant 0 : index
    %c0_14 = arith.constant 0 : index
    %c0_15 = arith.constant 0 : index
    %19 = vector.load %arg5[%c0_13, %c0_14, %c0_15] : memref<1x1x128xf32, #tpu.memory_space<vmem>>, vector<1x1x128xf32>
    %20 = vector.shape_cast %19 : vector<1x1x128xf32> to vector<1x128xf32>
    %21 = vector.broadcast %20 : vector<1x128xf32> to vector<128x128xf32>
    %22 = arith.addf %18, %21 : vector<128x128xf32>
    %23 = arith.truncf %22 : vector<128x128xf32> to vector<128x128xbf16>
    %c128_i32 = arith.constant 128 : i32
    %24 = arith.muli %arg1, %c128_i32 : i32
    %25 = tpu.assume_multiple %24, 128 : i32
    %c0_i32_16 = arith.constant 0 : i32
    %26 = arith.cmpi eq, %0, %c0_i32_16 : i32
    %27 = arith.andi %4, %26 : i1
    %28 = arith.extui %27 : i1 to i32
    %c0_i32_17 = arith.constant 0 : i32
    %29 = arith.cmpi ne, %28, %c0_i32_17 : i32
    scf.if %29 {
      %c0_21 = arith.constant 0 : index
      %36 = arith.index_cast %25 : i32 to index
      %c0_22 = arith.constant 0 : index
      %37 = vector.load %arg9[%c0_21, %36, %c0_22] : memref<2x128x128xbf16, #tpu.memory_space<vmem>>, vector<1x128x128xbf16>
      %38 = vector.shape_cast %37 : vector<1x128x128xbf16> to vector<128x128xbf16>
      %39 = vector.shape_cast %23 : vector<128x128xbf16> to vector<1x128x128xbf16>
      tpu.vector_store %arg9[%c0_21, %36, %c0_22], %39 {strides = array<i32>} : memref<2x128x128xbf16, #tpu.memory_space<vmem>>, vector<1x128x128xbf16>,
    } else {
    }
    %c1_i32_18 = arith.constant 1 : i32
    %30 = arith.cmpi eq, %0, %c1_i32_18 : i32
    %31 = arith.andi %4, %30 : i1
    %32 = arith.extui %31 : i1 to i32
    %c0_i32_19 = arith.constant 0 : i32
    %33 = arith.cmpi ne, %32, %c0_i32_19 : i32
    scf.if %33 {
      %c1 = arith.constant 1 : index
      %36 = arith.index_cast %25 : i32 to index
      %c0_21 = arith.constant 0 : index
      %37 = vector.load %arg9[%c1, %36, %c0_21] : memref<2x128x128xbf16, #tpu.memory_space<vmem>>, vector<1x128x128xbf16>
      %38 = vector.shape_cast %37 : vector<1x128x128xbf16> to vector<128x128xbf16>
      %39 = vector.shape_cast %23 : vector<128x128xbf16> to vector<1x128x128xbf16>
      tpu.vector_store %arg9[%c1, %36, %c0_21], %39 {strides = array<i32>} : memref<2x128x128xbf16, #tpu.memory_space<vmem>>, vector<1x128x128xbf16>,
    } else {
    }
    %34 = arith.extui %3 : i1 to i32
    %c0_i32_20 = arith.constant 0 : i32
    %35 = arith.cmpi ne, %34, %c0_i32_20 : i32
    scf.if %35 {
      %c0_21 = arith.constant 0 : index
      %c0_22 = arith.constant 0 : index
      %36 = vector.load %arg6[%c0_21, %c0_22] : memref<128x128xbf16, #tpu.memory_space<vmem>>, vector<128x128xbf16>
      %cst_23 = arith.constant dense<0.000000e+00> : vector<128x128xf32>
      %37 = tpu.matmul %23, %36, %cst_23 {dimension_numbers = #tpu.dot_dimension_numbers<[1], [0], [0], [1], [0, 0, 1, 1], [], []>} : vector<128x128xbf16>, vector<128x128xbf16>, vector<128x128xf32> -> vector<128x128xf32>
      %c0_24 = arith.constant 0 : index
      %c0_25 = arith.constant 0 : index
      %38 = vector.load %arg7[%c0_24, %c0_25] : memref<1x128xf32, #tpu.memory_space<vmem>>, vector<1x128xf32>
      %39 = vector.broadcast %38 : vector<1x128xf32> to vector<128x128xf32>
      %40 = arith.addf %37, %39 : vector<128x128xf32>
      %c0_26 = arith.constant 0 : index
      %c0_27 = arith.constant 0 : index
      %41 = vector.load %arg8[%c0_26, %c0_27] : memref<128x128xf32, #tpu.memory_space<vmem>>, vector<128x128xf32>
      tpu.vector_store %arg8[%c0_26, %c0_27], %40 {strides = array<i32>} : memref<128x128xf32, #tpu.memory_space<vmem>>, vector<128x128xf32>,
    } else {
    }
    return
  }
  func.func @transform_0(%arg0: i32, %arg1: i32) -> (i32, i32) {
    %c0_i32 = arith.constant 0 : i32
    %c0_i32_0 = arith.constant 0 : i32
    return %arg1, %c0_i32 : i32, i32
  }
  func.func @transform_1(%arg0: i32, %arg1: i32) -> (i32, i32) {
    %c0_i32 = arith.constant 0 : i32
    %c0_i32_0 = arith.constant 0 : i32
    %c0_i32_1 = arith.constant 0 : i32
    return %c0_i32, %c0_i32_0 : i32, i32
  }
  func.func @transform_2(%arg0: i32, %arg1: i32) -> (i32, i32, i32) {
    %c0_i32 = arith.constant 0 : i32
    %c0_i32_0 = arith.constant 0 : i32
    %c0_i32_1 = arith.constant 0 : i32
    return %arg0, %c0_i32, %c0_i32_0 : i32, i32, i32
  }
  func.func @transform_3(%arg0: i32, %arg1: i32) -> (i32, i32, i32) {
    %c0_i32 = arith.constant 0 : i32
    %c0_i32_0 = arith.constant 0 : i32
    %c0_i32_1 = arith.constant 0 : i32
    return %arg0, %c0_i32, %c0_i32_0 : i32, i32, i32
  }
  func.func @transform_4(%arg0: i32, %arg1: i32) -> (i32, i32) {
    %c0_i32 = arith.constant 0 : i32
    %c0_i32_0 = arith.constant 0 : i32
    %c0_i32_1 = arith.constant 0 : i32
    return %c0_i32, %c0_i32_0 : i32, i32
  }
  func.func @transform_5(%arg0: i32, %arg1: i32) -> (i32, i32) {
    %c0_i32 = arith.constant 0 : i32
    %c0_i32_0 = arith.constant 0 : i32
    %c0_i32_1 = arith.constant 0 : i32
    return %c0_i32, %c0_i32_0 : i32, i32
  }
  func.func @transform_6(%arg0: i32, %arg1: i32) -> (i32, i32) {
    %c0_i32 = arith.constant 0 : i32
    %c0_i32_0 = arith.constant 0 : i32
    return %arg1, %c0_i32 : i32, i32
  }
}

</mosaic_0001>

<llo_original>
// kernel: tpu_custom_call.1
$region0: #{tpu_custom_call.1}
  #allocation0 [shape = 'u32[]', space=smem, size = 0x4, offset = 0x4, fixed_abs, tag = 'smem constant byte address 0x4 - core index']
  #allocation1 [shape = 'u32[144,128]{1,0:T(1,128)}', space=vmem, size = 0x12000, scoped, tag = 'internal scratch']
  #allocation2 [shape = 'bf16[2,128,128]{2,1,0:T(16,128)(2,1)}', space=vmem, size = 0x10000, scoped, tag = 'scratch operand']
  %s0 = inlined_call_operand.hbm [shape: bf16[128,128], index: 0, kind: input, shape index: {}]
  %s1 = inlined_call_operand.hbm [shape: bf16[128,128], index: 1, kind: input, shape index: {}]
  %s2 = inlined_call_operand.hbm [shape: bf16[2,128,128], index: 2, kind: input, shape index: {}]
  %s3 = inlined_call_operand.vmem [shape: f32[2,1,128], index: 3, kind: input, shape index: {}]
  %s4 = inlined_call_operand.hbm [shape: bf16[128,128], index: 4, kind: input, shape index: {}]
  %s5 = inlined_call_operand.vmem [shape: f32[1,128], index: 5, kind: input, shape index: {}]
  %s6 = inlined_call_operand.hbm [shape: f32[128,128], index: 6, kind: output, shape index: {}]
  %s7 = sld [smem:[#allocation0]]
  $region89: #{tpu_custom_call.1} parent=0
    _
  %s9 = ssub.s32 1, %s7
  %s10 = scalar_select 0, %s9, %s7
  $region1: #{tpu_custom_call.1} parent=0
    #allocation3 [shape = 'u8[32768]{0}', space=vmem, size = 0x8000, scoped, tag = 'input window, operand 0, single buffered']
    #allocation4 [shape = 's32[2]{0}', space=sflag, size = 0x8, scoped, tag = 'scoped memory for tpu_custom_call.1']
    #allocation5 [shape = 's32[2]{0}', space=sflag, size = 0x8, scoped, tag = 'scoped memory for tpu_custom_call.1']
    #allocation6 [shape = 'u8[32768]{0}', space=vmem, size = 0x8000, scoped, tag = 'input window, operand 1, single buffered']
    #allocation7 [shape = 's32[1]{0}', space=sflag, size = 0x4, scoped, tag = 'scoped memory for tpu_custom_call.1']
    #allocation8 [shape = 'u8[65536]{0}', space=vmem, size = 0x10000, scoped, tag = 'input window, operand 2']
    #allocation9 [shape = 'u8[32768]{0}', space=vmem, size = 0x8000, scoped, tag = 'input window, operand 4, single buffered']
    #allocation10 [shape = 'u8[65536]{0}', space=vmem, size = 0x10000, scoped, tag = 'output window, operand 0, single buffered']
    %11 = vsyncpa [#allocation4], 0
    %12 = vsyncpa [#allocation7], 0
    %13 = vsyncpa [#allocation5], 0
    loop: start=0, step=1, limit=4
    $region2: #{tpu_custom_call.1} parent=1 // loop_pre_header
      _
    $region3: #{tpu_custom_call.1} parent=1 // loop_header
      %s15 = sphi 0, %s19
      %p16 = scmp.ge.s32.totalorder %s15, 4
      %s22 = sphi 0, %s34
      %s23 = sphi 0, %s30
      %s24 = sphi 0, %s22
      %s25 = sphi 0, %s23
      %s26 = sphi 0, %s24
      %s27 = sphi 0, %s25
      %s37 = sphi 0, %s39
      %s40 = sphi 0, %s37
      %s41 = sphi 0, %s40
      %s57 = sphi 0, %s41
      %s61 = sphi 0, %s61
      %s63 = sphi 0, %s61
      %s64 = sphi 0, %s63
      %s78 = sphi 0, %s64
      %s84 = sphi 0, %s86
      %s87 = sphi 0, %s84
      %s88 = sphi 0, %s87
      %s104 = sphi 0, %s88
      %s110 = sphi 0, %s112
      %s113 = sphi 0, %s110
      %s114 = sphi 0, %s113
      %s130 = sphi 0, %s114
      %s134 = sphi 0, %s134
      %s136 = sphi 0, %s134
      %s137 = sphi 0, %s136
      %s151 = sphi 0, %s137
      %s155 = sphi 0, %s155
      %s157 = sphi 0, %s155
      %s158 = sphi 0, %s157
      %s172 = sphi 0, %s158
      %s178 = sphi 0, %s180
      %s181 = sphi 0, %s178
      %s182 = sphi 0, %s181
      %s198 = sphi 0, %s182
    $region4: #{tpu_custom_call.1} parent=1 // loop_header_branch
      %18 = sbr.rel (%p16) target = $region8
    $region5: #{tpu_custom_call.1} parent=1 // loop_body
      %s20 = ssub.s32 %s15, 1
      %s21 = ssub.s32 %s15, 2
      %s28 = sadd.s32 1, %s23
      %p29 = scmp.ge.s32.totalorder %s28, 1
      %s30 = scalar_select %p29, 0, %s28
      %s31 = sadd.s32 1, %s22
      %s32 = scalar_select %p29, %s31, %s22
      %p33 = scmp.ge.s32.totalorder %s32, 2
      %s34 = scalar_select %p33, 0, %s32
      %s35 = ssub.s32 %s23, %s30
      %p36 = scmp.eq.s32.totalorder %s35, 0
      %s38 = sadd.s32 %s37, 1
      %s39 = scalar_select %p36, %s37, %s38
      %p42 = pneg %p36
      %p43 = scmp.eq.s32.totalorder %s15, 1
      %p44 = por %p42, %p43
      %p45 = scmp.ne.s32.totalorder %s37, %s40
      %p46 = scmp.eq.s32.totalorder %s15, 0
      %p47 = por %p45, %p46
      %p48 = scmp.ne.s32.totalorder %s37, %s40
      %p49 = scmp.eq.s32.totalorder %s20, 1
      %p50 = por %p48, %p49
      %p51 = scmp.ne.s32.totalorder %s40, %s41
      %p52 = scmp.eq.s32.totalorder %s20, 0
      %p53 = por %p51, %p52
      %p54 = scmp.ne.s32.totalorder %s40, %s41
      %p55 = scmp.eq.s32.totalorder %s21, 1
      %p56 = por %p54, %p55
      %p58 = scmp.ne.s32.totalorder %s41, %s57
      %p59 = scmp.eq.s32.totalorder %s21, 0
      %p60 = por %p58, %p59
      %s62 = sadd.s32 %s61, 1
      %p65 = scmp.eq.s32.totalorder %s15, 1
      %p66 = scmp.ne.s32.totalorder %s61, %s63
      %p67 = scmp.eq.s32.totalorder %s15, 0
      %p68 = por %p66, %p67
      %p69 = scmp.ne.s32.totalorder %s61, %s63
      %p70 = scmp.eq.s32.totalorder %s20, 1
      %p71 = por %p69, %p70
      %p72 = scmp.ne.s32.totalorder %s63, %s64
      %p73 = scmp.eq.s32.totalorder %s20, 0
      %p74 = por %p72, %p73
      %p75 = scmp.ne.s32.totalorder %s63, %s64
      %p76 = scmp.eq.s32.totalorder %s21, 1
      %p77 = por %p75, %p76
      %p79 = scmp.ne.s32.totalorder %s64, %s78
      %p80 = scmp.eq.s32.totalorder %s21, 0
      %p81 = por %p79, %p80
      %s82 = ssub.s32 %s22, %s34
      %p83 = scmp.eq.s32.totalorder %s82, 0
      %s85 = sadd.s32 %s84, 1
      %s86 = scalar_select %p83, %s84, %s85
      %p89 = pneg %p83
      %p90 = scmp.eq.s32.totalorder %s15, 1
      %p91 = por %p89, %p90
      %p92 = scmp.ne.s32.totalorder %s84, %s87
      %p93 = scmp.eq.s32.totalorder %s15, 0
      %p94 = por %p92, %p93
      %p95 = scmp.ne.s32.totalorder %s84, %s87
      %p96 = scmp.eq.s32.totalorder %s20, 1
      %p97 = por %p95, %p96
      %p98 = scmp.ne.s32.totalorder %s87, %s88
      %p99 = scmp.eq.s32.totalorder %s20, 0
      %p100 = por %p98, %p99
      %p101 = scmp.ne.s32.totalorder %s87, %s88
      %p102 = scmp.eq.s32.totalorder %s21, 1
      %p103 = por %p101, %p102
      %p105 = scmp.ne.s32.totalorder %s88, %s104
      %p106 = scmp.eq.s32.totalorder %s21, 0
      %p107 = por %p105, %p106
      %s108 = ssub.s32 %s22, %s34
      %p109 = scmp.eq.s32.totalorder %s108, 0
      %s111 = sadd.s32 %s110, 1
      %s112 = scalar_select %p109, %s110, %s111
      %p115 = pneg %p109
      %p116 = scmp.eq.s32.totalorder %s15, 1
      %p117 = por %p115, %p116
      %p118 = scmp.ne.s32.totalorder %s110, %s113
      %p119 = scmp.eq.s32.totalorder %s15, 0
      %p120 = por %p118, %p119
      %p121 = scmp.ne.s32.totalorder %s110, %s113
      %p122 = scmp.eq.s32.totalorder %s20, 1
      %p123 = por %p121, %p122
      %p124 = scmp.ne.s32.totalorder %s113, %s114
      %p125 = scmp.eq.s32.totalorder %s20, 0
      %p126 = por %p124, %p125
      %p127 = scmp.ne.s32.totalorder %s113, %s114
      %p128 = scmp.eq.s32.totalorder %s21, 1
      %p129 = por %p127, %p128
      %p131 = scmp.ne.s32.totalorder %s114, %s130
      %p132 = scmp.eq.s32.totalorder %s21, 0
      %p133 = por %p131, %p132
      %s135 = sadd.s32 %s134, 1
      %p138 = scmp.eq.s32.totalorder %s15, 1
      %p139 = scmp.ne.s32.totalorder %s134, %s136
      %p140 = scmp.eq.s32.totalorder %s15, 0
      %p141 = por %p139, %p140
      %p142 = scmp.ne.s32.totalorder %s134, %s136
      %p143 = scmp.eq.s32.totalorder %s20, 1
      %p144 = por %p142, %p143
      %p145 = scmp.ne.s32.totalorder %s136, %s137
      %p146 = scmp.eq.s32.totalorder %s20, 0
      %p147 = por %p145, %p146
      %p148 = scmp.ne.s32.totalorder %s136, %s137
      %p149 = scmp.eq.s32.totalorder %s21, 1
      %p150 = por %p148, %p149
      %p152 = scmp.ne.s32.totalorder %s137, %s151
      %p153 = scmp.eq.s32.totalorder %s21, 0
      %p154 = por %p152, %p153
      %s156 = sadd.s32 %s155, 1
      %p159 = scmp.eq.s32.totalorder %s15, 1
      %p160 = scmp.ne.s32.totalorder %s155, %s157
      %p161 = scmp.eq.s32.totalorder %s15, 0
      %p162 = por %p160, %p161
      %p163 = scmp.ne.s32.totalorder %s155, %s157
      %p164 = scmp.eq.s32.totalorder %s20, 1
      %p165 = por %p163, %p164
      %p166 = scmp.ne.s32.totalorder %s157, %s158
      %p167 = scmp.eq.s32.totalorder %s20, 0
      %p168 = por %p166, %p167
      %p169 = scmp.ne.s32.totalorder %s157, %s158
      %p170 = scmp.eq.s32.totalorder %s21, 1
      %p171 = por %p169, %p170
      %p173 = scmp.ne.s32.totalorder %s158, %s172
      %p174 = scmp.eq.s32.totalorder %s21, 0
      %p175 = por %p173, %p174
      %s176 = ssub.s32 %s23, %s30
      %p177 = scmp.eq.s32.totalorder %s176, 0
      %s179 = sadd.s32 %s178, 1
      %s180 = scalar_select %p177, %s178, %s179
      %p183 = pneg %p177
      %p184 = scmp.eq.s32.totalorder %s15, 1
      %p185 = por %p183, %p184
      %p186 = scmp.ne.s32.totalorder %s178, %s181
      %p187 = scmp.eq.s32.totalorder %s15, 0
      %p188 = por %p186, %p187
      %p189 = scmp.ne.s32.totalorder %s178, %s181
      %p190 = scmp.eq.s32.totalorder %s20, 1
      %p191 = por %p189, %p190
      %p192 = scmp.ne.s32.totalorder %s181, %s182
      %p193 = scmp.eq.s32.totalorder %s20, 0
      %p194 = por %p192, %p193
      %p195 = scmp.ne.s32.totalorder %s181, %s182
      %p196 = scmp.eq.s32.totalorder %s21, 1
      %p197 = por %p195, %p196
      %p199 = scmp.ne.s32.totalorder %s182, %s198
      %p200 = scmp.eq.s32.totalorder %s21, 0
      %p201 = por %p199, %p200
      %p202 = scmp.le.s32.totalorder 1, %s15
      %p203 = scmp.lt.s32.totalorder %s15, 3
      %p204 = pnand %p202, %p203
      %p205 = pneg %p204
      // Predicated region
      $region9: #{tpu_custom_call.1} parent=5 // pred_check
        _
      $region10: #{tpu_custom_call.1} parent=5 // pred_check_branch
        %207 = sbr.rel (%p204) target = $region12
      $region11: #{tpu_custom_call.1} parent=5 // pred_region
        %s208 = ssub.s32 %s15, 1
        // Predicated region
        $region13: #{tpu_custom_call.1} parent=11 // pred_check
          %p209 = pneg %p53
        $region14: #{tpu_custom_call.1} parent=11 // pred_check_branch
          %211 = sbr.rel (%p209) target = $region16
        $region15: #{tpu_custom_call.1} parent=11 // pred_region
          %s212 = smul.u32 16, %s25
          %s214 = ssub.s32 1024, 1024
          %215 = vsyncadd [#allocation4], %s214
          %s216 = smul.addr %s212, 64
          %s217 = scalar_lea.hbm %s0, %s216
          %s218 = sshll.u32 [#allocation3], 4
          %s219 = int_to_ptr.vmem [resolvable:$true] %s218
          %224 = dma.hbm_to_vmem [thread:$0]  %s217, 1024, %s219, [#allocation4], 64, 64, 4
        $region16: #{tpu_custom_call.1} parent=11 // pred_fallthru
          _
        // Predicated region
        $region17: #{tpu_custom_call.1} parent=11 // pred_check
          %p225 = pneg %p74
        $region18: #{tpu_custom_call.1} parent=11 // pred_check_branch
          %227 = sbr.rel (%p225) target = $region20
        $region19: #{tpu_custom_call.1} parent=11 // pred_region
          %s229 = ssub.s32 1024, 1024
          %230 = vsyncadd [#allocation7], %s229
          %s231 = sshll.u32 [#allocation6], 4
          %s232 = int_to_ptr.vmem [resolvable:$true] %s231
          %237 = dma.hbm_to_vmem [thread:$0]  %s1, 1024, %s232, [#allocation7], 64, 64, 4
        $region20: #{tpu_custom_call.1} parent=11 // pred_fallthru
          _
        // Predicated region
        $region21: #{tpu_custom_call.1} parent=11 // pred_check
          %p238 = pneg %p147
        $region22: #{tpu_custom_call.1} parent=11 // pred_check_branch
          %240 = sbr.rel (%p238) target = $region24
        $region23: #{tpu_custom_call.1} parent=11 // pred_region
          %s242 = ssub.s32 1024, 1024
          %243 = vsyncadd [#allocation7], %s242
          %s244 = sshll.u32 [#allocation9], 4
          %s245 = int_to_ptr.vmem [resolvable:$true] %s244
          %250 = dma.hbm_to_vmem [thread:$0]  %s4, 1024, %s245, [#allocation7], 64, 64, 4
        $region24: #{tpu_custom_call.1} parent=11 // pred_fallthru
          _
        // Predicated region
        $region25: #{tpu_custom_call.1} parent=11 // pred_check
          %p251 = pneg %p168
        $region26: #{tpu_custom_call.1} parent=11 // pred_check_branch
          %253 = sbr.rel (%p251) target = $region28
        $region27: #{tpu_custom_call.1} parent=11 // pred_region
          _
        $region28: #{tpu_custom_call.1} parent=11 // pred_fallthru
          _
      $region12: #{tpu_custom_call.1} parent=5 // pred_fallthru
        _
      %p254 = scmp.lt.s32.totalorder %s15, 2
      // Predicated region
      $region29: #{tpu_custom_call.1} parent=5 // pred_check
        %p255 = pneg %p254
      $region30: #{tpu_custom_call.1} parent=5 // pred_check_branch
        %257 = sbr.rel (%p255) target = $region32
      $region31: #{tpu_custom_call.1} parent=5 // pred_region
        // Predicated region
        $region33: #{tpu_custom_call.1} parent=31 // pred_check
          %p258 = pneg %p94
        $region34: #{tpu_custom_call.1} parent=31 // pred_check_branch
          %260 = sbr.rel (%p258) target = $region36
        $region35: #{tpu_custom_call.1} parent=31 // pred_region
          %s261 = sand.u32 %s15, 1
          %s262 = scalar_lea.sflag [#allocation4], %s261
          %s263 = sand.u32 %s84, 1
          %s264 = smul.addr %s263, 64
          %s265 = scalar_lea.vmem [#allocation8], %s264
          %s267 = ssub.s32 1024, 1024
          %268 = vsyncadd %s262, %s267
          %s269 = smul.addr %s22, 16
          %s270 = smul.addr %s269, 64
          %s271 = scalar_lea.hbm %s2, %s270
          %s272 = sshll.u32 %s265, 4
          %s273 = int_to_ptr.vmem [resolvable:$true] %s272
          %278 = dma.hbm_to_vmem [thread:$0]  %s271, 1024, %s273, %s262, 64, 64, 4
        $region36: #{tpu_custom_call.1} parent=31 // pred_fallthru
          _
        // Predicated region
        $region37: #{tpu_custom_call.1} parent=31 // pred_check
          %p279 = pneg %p120
        $region38: #{tpu_custom_call.1} parent=31 // pred_check_branch
          %281 = sbr.rel (%p279) target = $region40
        $region39: #{tpu_custom_call.1} parent=31 // pred_region
          %p282 = scmp.lt.s32.totalorder %s22, 1
          %s283 = scalar_select %p282, %s22, 1
          %s284 = scalar_lea.vmem %s3, %s283
        $region40: #{tpu_custom_call.1} parent=31 // pred_fallthru
          _
      $region32: #{tpu_custom_call.1} parent=5 // pred_fallthru
        _
      %p285 = scmp.le.s32.totalorder 1, %s15
      %p286 = scmp.lt.s32.totalorder %s15, 3
      %p287 = pnand %p285, %p286
      %p288 = pneg %p287
      // Predicated region
      $region41: #{tpu_custom_call.1} parent=5 // pred_check
        _
      $region42: #{tpu_custom_call.1} parent=5 // pred_check_branch
        %290 = sbr.rel (%p287) target = $region44
      $region43: #{tpu_custom_call.1} parent=5 // pred_region
        %s291 = ssub.s32 %s15, 1
        // Predicated region
        $region45: #{tpu_custom_call.1} parent=43 // pred_check
          %p292 = pneg %p53
        $region46: #{tpu_custom_call.1} parent=43 // pred_check_branch
          %294 = sbr.rel (%p292) target = $region48
        $region47: #{tpu_custom_call.1} parent=43 // pred_region
          %295 = dma.done [#allocation4], 1024
        $region48: #{tpu_custom_call.1} parent=43 // pred_fallthru
          _
        // Predicated region
        $region49: #{tpu_custom_call.1} parent=43 // pred_check
          %p296 = pneg %p74
        $region50: #{tpu_custom_call.1} parent=43 // pred_check_branch
          %298 = sbr.rel (%p296) target = $region52
        $region51: #{tpu_custom_call.1} parent=43 // pred_region
          %299 = dma.done [#allocation7], 1024
        $region52: #{tpu_custom_call.1} parent=43 // pred_fallthru
          _
        %s300 = sand.u32 %s20, 1
        %s301 = scalar_lea.sflag [#allocation4], %s300
        %s302 = sand.u32 %s87, 1
        %s303 = smul.addr %s302, 64
        %s304 = scalar_lea.vmem [#allocation8], %s303
        // Predicated region
        $region53: #{tpu_custom_call.1} parent=43 // pred_check
          %p305 = pneg %p100
        $region54: #{tpu_custom_call.1} parent=43 // pred_check_branch
          %307 = sbr.rel (%p305) target = $region56
        $region55: #{tpu_custom_call.1} parent=43 // pred_region
          %308 = dma.done %s301, 1024
        $region56: #{tpu_custom_call.1} parent=43 // pred_fallthru
          _
        // Predicated region
        $region57: #{tpu_custom_call.1} parent=43 // pred_check
          %p309 = pneg %p147
        $region58: #{tpu_custom_call.1} parent=43 // pred_check_branch
          %311 = sbr.rel (%p309) target = $region60
        $region59: #{tpu_custom_call.1} parent=43 // pred_region
          %312 = dma.done [#allocation7], 1024
        $region60: #{tpu_custom_call.1} parent=43 // pred_fallthru
          _
        %p313 = pneg %p53
        %p314 = pneg %p50
        %p315 = pneg %p74
        %p316 = pneg %p71
        %s317 = sand.u32 %s20, 1
        %s318 = scalar_lea.sflag [#allocation4], %s317
        %s319 = sand.u32 %s87, 1
        %s320 = smul.addr %s319, 64
        %s321 = scalar_lea.vmem [#allocation8], %s320
        %p322 = pneg %p100
        %p323 = pneg %p97
        %p324 = scmp.lt.s32.totalorder %s24, 1
        %s325 = scalar_select %p324, %s24, 1
        %s326 = scalar_lea.vmem %s3, %s325
        %p327 = pneg %p126
        %p328 = pneg %p123
        %p329 = pneg %p147
        %p330 = pneg %p144
        %p331 = pneg %p168
        %p332 = pneg %p165
        %p333 = pneg %p194
        %p334 = pneg %p191
        %s335 = smul.u32 16, %s25
        %p336 = scmp.lt.s32.totalorder %s24, 1
        %s337 = scalar_select %p336, %s24, 1
        %s338 = scalar_lea.vmem %s3, %s337
        %s339 = smul.u32 16, %s25
        %s341 = sand.u32 %s24, 1
        %s342 = sadd.s32 %s24, 1
        %s343 = sand.u32 %s342, 1
        %p344 = scmp.eq.s32.totalorder %s24, 1
        %p345 = scmp.lt.s32.totalorder %s24, 1
        %p346 = scmp.eq.s32.totalorder %s24, 0
        %p347 = scmp.eq.s32.totalorder %s25, 0
        %p348 = pnand %p346, %p347
        %p349 = pneg %p348
        // Predicated region
        $region61: #{tpu_custom_call.1} parent=43 // pred_check
          _
        $region62: #{tpu_custom_call.1} parent=43 // pred_check_branch
          %351 = sbr.rel (%p348) target = $region64
        $region63: #{tpu_custom_call.1} parent=43 // pred_region
          %v352 = vld [vmem:[#allocation6] sm:$0xf]
          %v353 = vld [vmem:[#allocation6 + $0x4] sm:$0xf]
          %v354 = vld [vmem:[#allocation6 + $0x8] sm:$0xf]
          %v355 = vld [vmem:[#allocation6 + $0xc] sm:$0xf]
          %v356 = vld [vmem:[#allocation6 + $0x10] sm:$0xf]
          %v357 = vld [vmem:[#allocation6 + $0x14] sm:$0xf]
          %v358 = vld [vmem:[#allocation6 + $0x18] sm:$0xf]
          %v359 = vld [vmem:[#allocation6 + $0x1c] sm:$0xf]
          %v360 = vld [vmem:[#allocation6 + $0x20] sm:$0xf]
          %v361 = vld [vmem:[#allocation6 + $0x24] sm:$0xf]
          %v362 = vld [vmem:[#allocation6 + $0x28] sm:$0xf]
          %v363 = vld [vmem:[#allocation6 + $0x2c] sm:$0xf]
          %v364 = vld [vmem:[#allocation6 + $0x30] sm:$0xf]
          %v365 = vld [vmem:[#allocation6 + $0x34] sm:$0xf]
          %v366 = vld [vmem:[#allocation6 + $0x38] sm:$0xf]
          %v367 = vld [vmem:[#allocation6 + $0x3c] sm:$0xf]
          %v384 = vunpack.c.l.b16 %v352
          %v385 = vunpack.c.l.b16 %v353
          %v386 = vunpack.c.l.b16 %v354
          %v387 = vunpack.c.l.b16 %v355
          %v388 = vunpack.c.l.b16 %v356
          %v389 = vunpack.c.l.b16 %v357
          %v390 = vunpack.c.l.b16 %v358
          %v391 = vunpack.c.l.b16 %v359
          %v392 = vunpack.c.l.b16 %v360
          %v393 = vunpack.c.l.b16 %v361
          %v394 = vunpack.c.l.b16 %v362
          %v395 = vunpack.c.l.b16 %v363
          %v396 = vunpack.c.l.b16 %v364
          %v397 = vunpack.c.l.b16 %v365
          %v398 = vunpack.c.l.b16 %v366
          %v399 = vunpack.c.l.b16 %v367
          %v400 = vpack.c.b16 %v385, %v384
          %v401 = vpack.c.b16 %v387, %v386
          %v402 = vpack.c.b16 %v389, %v388
          %v403 = vpack.c.b16 %v391, %v390
          %v404 = vpack.c.b16 %v393, %v392
          %v405 = vpack.c.b16 %v395, %v394
          %v406 = vpack.c.b16 %v397, %v396
          %v407 = vpack.c.b16 %v399, %v398
          %s416 = scalar_lea.vmem [#allocation2], 64
          %417 = vst [vmem:[%s416] sm:$0xff] %v400
          %418 = vst [vmem:[%s416 + $0x8] sm:$0xff] %v401
          %419 = vst [vmem:[%s416 + $0x10] sm:$0xff] %v402
          %420 = vst [vmem:[%s416 + $0x18] sm:$0xff] %v403
          %421 = vst [vmem:[%s416 + $0x20] sm:$0xff] %v404
          %422 = vst [vmem:[%s416 + $0x28] sm:$0xff] %v405
          %423 = vst [vmem:[%s416 + $0x30] sm:$0xff] %v406
          %424 = vst [vmem:[%s416 + $0x38] sm:$0xff] %v407
        $region64: #{tpu_custom_call.1} parent=43 // pred_fallthru
          _
        %v425 = vld [vmem:[#allocation3] sm:$0xf]
        %v426 = vld [vmem:[#allocation3 + $0x4] sm:$0xf]
        %v427 = vld [vmem:[#allocation3 + $0x8] sm:$0xf]
        %v428 = vld [vmem:[#allocation3 + $0xc] sm:$0xf]
        %v429 = vld [vmem:[#allocation3 + $0x10] sm:$0xf]
        %v430 = vld [vmem:[#allocation3 + $0x14] sm:$0xf]
        %v431 = vld [vmem:[#allocation3 + $0x18] sm:$0xf]
        %v432 = vld [vmem:[#allocation3 + $0x1c] sm:$0xf]
        %v433 = vld [vmem:[#allocation3 + $0x20] sm:$0xf]
        %v434 = vld [vmem:[#allocation3 + $0x24] sm:$0xf]
        %v435 = vld [vmem:[#allocation3 + $0x28] sm:$0xf]
        %v436 = vld [vmem:[#allocation3 + $0x2c] sm:$0xf]
        %v437 = vld [vmem:[#allocation3 + $0x30] sm:$0xf]
        %v438 = vld [vmem:[#allocation3 + $0x34] sm:$0xf]
        %v439 = vld [vmem:[#allocation3 + $0x38] sm:$0xf]
        %v440 = vld [vmem:[#allocation3 + $0x3c] sm:$0xf]
        %s441 = smul.u32 %s343, 8
        %s442 = smul.addr %s441, 8
        %s443 = scalar_lea.vmem [#allocation2], %s442
        %v444 = vld [vmem:[%s443] sm:$0xff]
        %v445 = vld [vmem:[%s443 + $0x8] sm:$0xff]
        %v446 = vld [vmem:[%s443 + $0x10] sm:$0xff]
        %v447 = vld [vmem:[%s443 + $0x18] sm:$0xff]
        %v448 = vld [vmem:[%s443 + $0x20] sm:$0xff]
        %v449 = vld [vmem:[%s443 + $0x28] sm:$0xff]
        %v450 = vld [vmem:[%s443 + $0x30] sm:$0xff]
        %v451 = vld [vmem:[%s443 + $0x38] sm:$0xff]
        %v468 = vunpack.c.l.b16 %v425
        %v469 = vunpack.c.l.b16 %v426
        %v470 = vunpack.c.l.b16 %v427
        %v471 = vunpack.c.l.b16 %v428
        %v472 = vunpack.c.l.b16 %v429
        %v473 = vunpack.c.l.b16 %v430
        %v474 = vunpack.c.l.b16 %v431
        %v475 = vunpack.c.l.b16 %v432
        %v476 = vunpack.c.l.b16 %v433
        %v477 = vunpack.c.l.b16 %v434
        %v478 = vunpack.c.l.b16 %v435
        %v479 = vunpack.c.l.b16 %v436
        %v480 = vunpack.c.l.b16 %v437
        %v481 = vunpack.c.l.b16 %v438
        %v482 = vunpack.c.l.b16 %v439
        %v483 = vunpack.c.l.b16 %v440
        %v484 = vpack.c.b16 %v469, %v468
        %v485 = vpack.c.b16 %v471, %v470
        %v486 = vpack.c.b16 %v473, %v472
        %v487 = vpack.c.b16 %v475, %v474
        %v488 = vpack.c.b16 %v477, %v476
        %v489 = vpack.c.b16 %v479, %v478
        %v490 = vpack.c.b16 %v481, %v480
        %v491 = vpack.c.b16 %v483, %v482
        %500 = vmatprep.subr.bf16.mxu0 0
        %501 = vmatpush1.bf16.msra.mxu0 %v444
        %502 = vmatprep.subr.bf16.mxu0 0
        %503 = vmatpush1.bf16.msra.mxu0 %v445
        %504 = vmatprep.subr.bf16.mxu0 0
        %505 = vmatpush1.bf16.msra.mxu0 %v446
        %506 = vmatprep.subr.bf16.mxu0 0
        %507 = vmatpush1.bf16.msra.mxu0 %v447
        %508 = vmatprep.subr.bf16.mxu0 0
        %509 = vmatpush1.bf16.msra.mxu0 %v448
        %510 = vmatprep.subr.bf16.mxu0 0
        %511 = vmatpush1.bf16.msra.mxu0 %v449
        %512 = vmatprep.subr.bf16.mxu0 0
        %513 = vmatpush1.bf16.msra.mxu0 %v450
        %514 = vmatprep.subr.bf16.mxu0 0
        %515 = vmatpush1.bf16.msra.mxu0 %v451
        %516 = vmatprep.subr.bf16.mxu0 0
        %517 = vmatpush1.bf16.msra.mxu0 0
        %518 = vmatprep.subr.bf16.mxu0 0
        %519 = vmatpush1.bf16.msra.mxu0 0
        %520 = vmatprep.subr.bf16.mxu0 0
        %521 = vmatpush1.bf16.msra.mxu0 0
        %522 = vmatprep.subr.bf16.mxu0 0
        %523 = vmatpush1.bf16.msra.mxu0 0
        %524 = vmatprep.subr.bf16.mxu0 0
        %525 = vmatpush1.bf16.msra.mxu0 0
        %526 = vmatprep.subr.bf16.mxu0 0
        %527 = vmatpush1.bf16.msra.mxu0 0
        %528 = vmatprep.subr.bf16.mxu0 0
        %529 = vmatpush1.bf16.msra.mxu0 0
        %530 = vmatprep.subr.bf16.mxu0 0
        %531 = vmatpush1.bf16.msra.mxu0 0
        %532 = vmatprep.mubr.bf16.mxu0 0
        %533 = vmatmul.mubr.bf16.gmra.mrb[0].mxu0 %v484
        %v534 = vpop.f32.mrb[0].mxu0
        %v535 = vadd.f32 0.0, %v534
        %v536 = vpop.f32.mrb[0].mxu0
        %v537 = vpop.f32.mrb[0].mxu0
        %v538 = vadd.f32 0.0, %v537
        %v539 = vpop.f32.mrb[0].mxu0
        %540 = vmatprep.mubr.bf16.mxu0 0
        %541 = vmatmul.mubr.bf16.gmra.mrb[0].mxu0 %v485
        %v542 = vpop.f32.mrb[0].mxu0
        %v543 = vadd.f32 0.0, %v542
        %v544 = vpop.f32.mrb[0].mxu0
        %v545 = vpop.f32.mrb[0].mxu0
        %v546 = vadd.f32 0.0, %v545
        %v547 = vpop.f32.mrb[0].mxu0
        %548 = vmatprep.mubr.bf16.mxu0 0
        %549 = vmatmul.mubr.bf16.gmra.mrb[0].mxu0 %v486
        %v550 = vpop.f32.mrb[0].mxu0
        %v551 = vadd.f32 0.0, %v550
        %v552 = vpop.f32.mrb[0].mxu0
        %v553 = vpop.f32.mrb[0].mxu0
        %v554 = vadd.f32 0.0, %v553
        %v555 = vpop.f32.mrb[0].mxu0
        %556 = vmatprep.mubr.bf16.mxu0 0
        %557 = vmatmul.mubr.bf16.gmra.mrb[0].mxu0 %v487
        %v558 = vpop.f32.mrb[0].mxu0
        %v559 = vadd.f32 0.0, %v558
        %v560 = vpop.f32.mrb[0].mxu0
        %v561 = vpop.f32.mrb[0].mxu0
        %v562 = vadd.f32 0.0, %v561
        %v563 = vpop.f32.mrb[0].mxu0
        %564 = vmatprep.mubr.bf16.mxu0 0
        %565 = vmatmul.mubr.bf16.gmra.mrb[0].mxu0 %v488
        %v566 = vpop.f32.mrb[0].mxu0
        %v567 = vadd.f32 0.0, %v566
        %v568 = vpop.f32.mrb[0].mxu0
        %v569 = vpop.f32.mrb[0].mxu0
        %v570 = vadd.f32 0.0, %v569
        %v571 = vpop.f32.mrb[0].mxu0
        %572 = vmatprep.mubr.bf16.mxu0 0
        %573 = vmatmul.mubr.bf16.gmra.mrb[0].mxu0 %v489
        %v574 = vpop.f32.mrb[0].mxu0
        %v575 = vadd.f32 0.0, %v574
        %v576 = vpop.f32.mrb[0].mxu0
        %v577 = vpop.f32.mrb[0].mxu0
        %v578 = vadd.f32 0.0, %v577
        %v579 = vpop.f32.mrb[0].mxu0
        %580 = vmatprep.mubr.bf16.mxu0 0
        %581 = vmatmul.mubr.bf16.gmra.mrb[0].mxu0 %v490
        %v582 = vpop.f32.mrb[0].mxu0
        %v583 = vadd.f32 0.0, %v582
        %v584 = vpop.f32.mrb[0].mxu0
        %v585 = vpop.f32.mrb[0].mxu0
        %v586 = vadd.f32 0.0, %v585
        %v587 = vpop.f32.mrb[0].mxu0
        %588 = vmatprep.mubr.bf16.mxu0 0
        %589 = vmatmul.mubr.bf16.gmra.mrb[0].mxu0 %v491
        %v590 = vpop.f32.mrb[0].mxu0
        %v591 = vadd.f32 0.0, %v590
        %v592 = vpop.f32.mrb[0].mxu0
        %v593 = vpop.f32.mrb[0].mxu0
        %v594 = vadd.f32 0.0, %v593
        %v595 = vpop.f32.mrb[0].mxu0
        %596 = vdwg.mxu0
        %v597 = vpack.c.bf16 %v538, %v535
        %v598 = vpack.c.bf16 %v546, %v543
        %v599 = vpack.c.bf16 %v554, %v551
        %v600 = vpack.c.bf16 %v562, %v559
        %v601 = vpack.c.bf16 %v570, %v567
        %v602 = vpack.c.bf16 %v578, %v575
        %v603 = vpack.c.bf16 %v586, %v583
        %v604 = vpack.c.bf16 %v594, %v591
        %v605 = vld [vmem:[%s304] sm:$0xf]
        %v606 = vld [vmem:[%s304 + $0x4] sm:$0xf]
        %v607 = vld [vmem:[%s304 + $0x8] sm:$0xf]
        %v608 = vld [vmem:[%s304 + $0xc] sm:$0xf]
        %v609 = vld [vmem:[%s304 + $0x10] sm:$0xf]
        %v610 = vld [vmem:[%s304 + $0x14] sm:$0xf]
        %v611 = vld [vmem:[%s304 + $0x18] sm:$0xf]
        %v612 = vld [vmem:[%s304 + $0x1c] sm:$0xf]
        %v613 = vld [vmem:[%s304 + $0x20] sm:$0xf]
        %v614 = vld [vmem:[%s304 + $0x24] sm:$0xf]
        %v615 = vld [vmem:[%s304 + $0x28] sm:$0xf]
        %v616 = vld [vmem:[%s304 + $0x2c] sm:$0xf]
        %v617 = vld [vmem:[%s304 + $0x30] sm:$0xf]
        %v618 = vld [vmem:[%s304 + $0x34] sm:$0xf]
        %v619 = vld [vmem:[%s304 + $0x38] sm:$0xf]
        %v620 = vld [vmem:[%s304 + $0x3c] sm:$0xf]
        %v621 = vld [vmem:[%s338] sm:$0x1]
        %v623 = vlaneseq
        %v624 = vshrl.u32 %v623, 7
        %v625 = vsub.s32 0, %v624
        %v626 = vrot.slane %v621, %v625
        %v644 = vunpack.c.l.b16 %v605
        %v645 = vunpack.c.l.b16 %v606
        %v646 = vunpack.c.l.b16 %v607
        %v647 = vunpack.c.l.b16 %v608
        %v648 = vunpack.c.l.b16 %v609
        %v649 = vunpack.c.l.b16 %v610
        %v650 = vunpack.c.l.b16 %v611
        %v651 = vunpack.c.l.b16 %v612
        %v652 = vunpack.c.l.b16 %v613
        %v653 = vunpack.c.l.b16 %v614
        %v654 = vunpack.c.l.b16 %v615
        %v655 = vunpack.c.l.b16 %v616
        %v656 = vunpack.c.l.b16 %v617
        %v657 = vunpack.c.l.b16 %v618
        %v658 = vunpack.c.l.b16 %v619
        %v659 = vunpack.c.l.b16 %v620
        %v660 = vpack.c.b16 %v645, %v644
        %v661 = vpack.c.b16 %v647, %v646
        %v662 = vpack.c.b16 %v649, %v648
        %v663 = vpack.c.b16 %v651, %v650
        %v664 = vpack.c.b16 %v653, %v652
        %v665 = vpack.c.b16 %v655, %v654
        %v666 = vpack.c.b16 %v657, %v656
        %v667 = vpack.c.b16 %v659, %v658
        %676 = vmatprep.subr.bf16.mxu0 0
        %677 = vmatpush1.bf16.msra.mxu0 %v660
        %678 = vmatprep.subr.bf16.mxu0 0
        %679 = vmatpush1.bf16.msra.mxu0 %v661
        %680 = vmatprep.subr.bf16.mxu0 0
        %681 = vmatpush1.bf16.msra.mxu0 %v662
        %682 = vmatprep.subr.bf16.mxu0 0
        %683 = vmatpush1.bf16.msra.mxu0 %v663
        %684 = vmatprep.subr.bf16.mxu0 0
        %685 = vmatpush1.bf16.msra.mxu0 %v664
        %686 = vmatprep.subr.bf16.mxu0 0
        %687 = vmatpush1.bf16.msra.mxu0 %v665
        %688 = vmatprep.subr.bf16.mxu0 0
        %689 = vmatpush1.bf16.msra.mxu0 %v666
        %690 = vmatprep.subr.bf16.mxu0 0
        %691 = vmatpush1.bf16.msra.mxu0 %v667
        %692 = vmatprep.subr.bf16.mxu0 0
        %693 = vmatpush1.bf16.msra.mxu0 0
        %694 = vmatprep.subr.bf16.mxu0 0
        %695 = vmatpush1.bf16.msra.mxu0 0
        %696 = vmatprep.subr.bf16.mxu0 0
        %697 = vmatpush1.bf16.msra.mxu0 0
        %698 = vmatprep.subr.bf16.mxu0 0
        %699 = vmatpush1.bf16.msra.mxu0 0
        %700 = vmatprep.subr.bf16.mxu0 0
        %701 = vmatpush1.bf16.msra.mxu0 0
        %702 = vmatprep.subr.bf16.mxu0 0
        %703 = vmatpush1.bf16.msra.mxu0 0
        %704 = vmatprep.subr.bf16.mxu0 0
        %705 = vmatpush1.bf16.msra.mxu0 0
        %706 = vmatprep.subr.bf16.mxu0 0
        %707 = vmatpush1.bf16.msra.mxu0 0
        %708 = vmatprep.mubr.bf16.mxu0 0
        %709 = vmatmul.mubr.bf16.gmra.mrb[0].mxu0 %v597
        %v710 = vpop.f32.mrb[0].mxu0
        %v711 = vadd.f32 %v626, %v710
        %v712 = vpop.f32.mrb[0].mxu0
        %v713 = vpop.f32.mrb[0].mxu0
        %v714 = vadd.f32 %v626, %v713
        %v715 = vpop.f32.mrb[0].mxu0
        %716 = vmatprep.mubr.bf16.mxu0 0
        %717 = vmatmul.mubr.bf16.gmra.mrb[0].mxu0 %v598
        %v718 = vpop.f32.mrb[0].mxu0
        %v719 = vadd.f32 %v626, %v718
        %v720 = vpop.f32.mrb[0].mxu0
        %v721 = vpop.f32.mrb[0].mxu0
        %v722 = vadd.f32 %v626, %v721
        %v723 = vpop.f32.mrb[0].mxu0
        %724 = vmatprep.mubr.bf16.mxu0 0
        %725 = vmatmul.mubr.bf16.gmra.mrb[0].mxu0 %v599
        %v726 = vpop.f32.mrb[0].mxu0
        %v727 = vadd.f32 %v626, %v726
        %v728 = vpop.f32.mrb[0].mxu0
        %v729 = vpop.f32.mrb[0].mxu0
        %v730 = vadd.f32 %v626, %v729
        %v731 = vpop.f32.mrb[0].mxu0
        %732 = vmatprep.mubr.bf16.mxu0 0
        %733 = vmatmul.mubr.bf16.gmra.mrb[0].mxu0 %v600
        %v734 = vpop.f32.mrb[0].mxu0
        %v735 = vadd.f32 %v626, %v734
        %v736 = vpop.f32.mrb[0].mxu0
        %v737 = vpop.f32.mrb[0].mxu0
        %v738 = vadd.f32 %v626, %v737
        %v739 = vpop.f32.mrb[0].mxu0
        %740 = vmatprep.mubr.bf16.mxu0 0
        %741 = vmatmul.mubr.bf16.gmra.mrb[0].mxu0 %v601
        %v742 = vpop.f32.mrb[0].mxu0
        %v743 = vadd.f32 %v626, %v742
        %v744 = vpop.f32.mrb[0].mxu0
        %v745 = vpop.f32.mrb[0].mxu0
        %v746 = vadd.f32 %v626, %v745
        %v747 = vpop.f32.mrb[0].mxu0
        %748 = vmatprep.mubr.bf16.mxu0 0
        %749 = vmatmul.mubr.bf16.gmra.mrb[0].mxu0 %v602
        %v750 = vpop.f32.mrb[0].mxu0
        %v751 = vadd.f32 %v626, %v750
        %v752 = vpop.f32.mrb[0].mxu0
        %v753 = vpop.f32.mrb[0].mxu0
        %v754 = vadd.f32 %v626, %v753
        %v755 = vpop.f32.mrb[0].mxu0
        %756 = vmatprep.mubr.bf16.mxu0 0
        %757 = vmatmul.mubr.bf16.gmra.mrb[0].mxu0 %v603
        %v758 = vpop.f32.mrb[0].mxu0
        %v759 = vadd.f32 %v626, %v758
        %v760 = vpop.f32.mrb[0].mxu0
        %v761 = vpop.f32.mrb[0].mxu0
        %v762 = vadd.f32 %v626, %v761
        %v763 = vpop.f32.mrb[0].mxu0
        %764 = vmatprep.mubr.bf16.mxu0 0
        %765 = vmatmul.mubr.bf16.gmra.mrb[0].mxu0 %v604
        %v766 = vpop.f32.mrb[0].mxu0
        %v767 = vadd.f32 %v626, %v766
        %v768 = vpop.f32.mrb[0].mxu0
        %v769 = vpop.f32.mrb[0].mxu0
        %v770 = vadd.f32 %v626, %v769
        %v771 = vpop.f32.mrb[0].mxu0
        %772 = vdwg.mxu0
        %v773 = vpack.c.bf16 %v714, %v711
        %v774 = vpack.c.bf16 %v722, %v719
        %v775 = vpack.c.bf16 %v730, %v727
        %v776 = vpack.c.bf16 %v738, %v735
        %v777 = vpack.c.bf16 %v746, %v743
        %v778 = vpack.c.bf16 %v754, %v751
        %v779 = vpack.c.bf16 %v762, %v759
        %v780 = vpack.c.bf16 %v770, %v767
        %s781 = smul.u32 %s25, 128
        %p782 = scmp.eq.s32.totalorder %s341, 0
        %p783 = pnand %p345, %p782
        %p784 = pneg %p783
        // Predicated region
        $region65: #{tpu_custom_call.1} parent=43 // pred_check
          _
        $region66: #{tpu_custom_call.1} parent=43 // pred_check_branch
          %786 = sbr.rel (%p783) target = $region68
        $region67: #{tpu_custom_call.1} parent=43 // pred_region
          %s787 = sshra.s32 %s781, 4
          %s788 = sand.u32 %s781, 15
          %s789 = smul.addr %s787, 8
          %s790 = scalar_lea.vmem [#allocation2], %s789
          %791 = vst [vmem:[%s790] sm:$0xff] %v773
          %792 = vst [vmem:[%s790 + $0x8] sm:$0xff] %v774
          %793 = vst [vmem:[%s790 + $0x10] sm:$0xff] %v775
          %794 = vst [vmem:[%s790 + $0x18] sm:$0xff] %v776
          %795 = vst [vmem:[%s790 + $0x20] sm:$0xff] %v777
          %796 = vst [vmem:[%s790 + $0x28] sm:$0xff] %v778
          %797 = vst [vmem:[%s790 + $0x30] sm:$0xff] %v779
          %798 = vst [vmem:[%s790 + $0x38] sm:$0xff] %v780
        $region68: #{tpu_custom_call.1} parent=43 // pred_fallthru
          _
        %p799 = scmp.eq.s32.totalorder %s341, 1
        %p800 = pnand %p345, %p799
        %p801 = pneg %p800
        // Predicated region
        $region69: #{tpu_custom_call.1} parent=43 // pred_check
          _
        $region70: #{tpu_custom_call.1} parent=43 // pred_check_branch
          %803 = sbr.rel (%p800) target = $region72
        $region71: #{tpu_custom_call.1} parent=43 // pred_region
          %s804 = sshra.s32 %s781, 4
          %s805 = sand.u32 %s781, 15
          %s806 = sadd.s32 %s804, 8
          %s807 = smul.addr %s806, 8
          %s808 = scalar_lea.vmem [#allocation2], %s807
          %809 = vst [vmem:[%s808] sm:$0xff] %v773
          %810 = vst [vmem:[%s808 + $0x8] sm:$0xff] %v774
          %811 = vst [vmem:[%s808 + $0x10] sm:$0xff] %v775
          %812 = vst [vmem:[%s808 + $0x18] sm:$0xff] %v776
          %813 = vst [vmem:[%s808 + $0x20] sm:$0xff] %v777
          %814 = vst [vmem:[%s808 + $0x28] sm:$0xff] %v778
          %815 = vst [vmem:[%s808 + $0x30] sm:$0xff] %v779
          %816 = vst [vmem:[%s808 + $0x38] sm:$0xff] %v780
        $region72: #{tpu_custom_call.1} parent=43 // pred_fallthru
          _
        // Predicated region
        $region73: #{tpu_custom_call.1} parent=43 // pred_check
          %p817 = pneg %p344
        $region74: #{tpu_custom_call.1} parent=43 // pred_check_branch
          %819 = sbr.rel (%p817) target = $region76
        $region75: #{tpu_custom_call.1} parent=43 // pred_region
          %v820 = vld [vmem:[#allocation9] sm:$0xf]
          %v821 = vld [vmem:[#allocation9 + $0x4] sm:$0xf]
          %v822 = vld [vmem:[#allocation9 + $0x8] sm:$0xf]
          %v823 = vld [vmem:[#allocation9 + $0xc] sm:$0xf]
          %v824 = vld [vmem:[#allocation9 + $0x10] sm:$0xf]
          %v825 = vld [vmem:[#allocation9 + $0x14] sm:$0xf]
          %v826 = vld [vmem:[#allocation9 + $0x18] sm:$0xf]
          %v827 = vld [vmem:[#allocation9 + $0x1c] sm:$0xf]
          %v828 = vld [vmem:[#allocation9 + $0x20] sm:$0xf]
          %v829 = vld [vmem:[#allocation9 + $0x24] sm:$0xf]
          %v830 = vld [vmem:[#allocation9 + $0x28] sm:$0xf]
          %v831 = vld [vmem:[#allocation9 + $0x2c] sm:$0xf]
          %v832 = vld [vmem:[#allocation9 + $0x30] sm:$0xf]
          %v833 = vld [vmem:[#allocation9 + $0x34] sm:$0xf]
          %v834 = vld [vmem:[#allocation9 + $0x38] sm:$0xf]
          %v835 = vld [vmem:[#allocation9 + $0x3c] sm:$0xf]
          %v836 = vld [vmem:[%s5] sm:$0x1]
          %v838 = vlaneseq
          %v839 = vshrl.u32 %v838, 7
          %v840 = vsub.s32 0, %v839
          %v841 = vrot.slane %v836, %v840
          %v859 = vunpack.c.l.b16 %v820
          %v860 = vunpack.c.l.b16 %v821
          %v861 = vunpack.c.l.b16 %v822
          %v862 = vunpack.c.l.b16 %v823
          %v863 = vunpack.c.l.b16 %v824
          %v864 = vunpack.c.l.b16 %v825
          %v865 = vunpack.c.l.b16 %v826
          %v866 = vunpack.c.l.b16 %v827
          %v867 = vunpack.c.l.b16 %v828
          %v868 = vunpack.c.l.b16 %v829
          %v869 = vunpack.c.l.b16 %v830
          %v870 = vunpack.c.l.b16 %v831
          %v871 = vunpack.c.l.b16 %v832
          %v872 = vunpack.c.l.b16 %v833
          %v873 = vunpack.c.l.b16 %v834
          %v874 = vunpack.c.l.b16 %v835
          %v875 = vpack.c.b16 %v860, %v859
          %v876 = vpack.c.b16 %v862, %v861
          %v877 = vpack.c.b16 %v864, %v863
          %v878 = vpack.c.b16 %v866, %v865
          %v879 = vpack.c.b16 %v868, %v867
          %v880 = vpack.c.b16 %v870, %v869
          %v881 = vpack.c.b16 %v872, %v871
          %v882 = vpack.c.b16 %v874, %v873
          %891 = vmatprep.subr.bf16.mxu0 0
          %892 = vmatpush1.bf16.msra.mxu0 %v875
          %893 = vmatprep.subr.bf16.mxu0 0
          %894 = vmatpush1.bf16.msra.mxu0 %v876
          %895 = vmatprep.subr.bf16.mxu0 0
          %896 = vmatpush1.bf16.msra.mxu0 %v877
          %897 = vmatprep.subr.bf16.mxu0 0
          %898 = vmatpush1.bf16.msra.mxu0 %v878
          %899 = vmatprep.subr.bf16.mxu0 0
          %900 = vmatpush1.bf16.msra.mxu0 %v879
          %901 = vmatprep.subr.bf16.mxu0 0
          %902 = vmatpush1.bf16.msra.mxu0 %v880
          %903 = vmatprep.subr.bf16.mxu0 0
          %904 = vmatpush1.bf16.msra.mxu0 %v881
          %905 = vmatprep.subr.bf16.mxu0 0
          %906 = vmatpush1.bf16.msra.mxu0 %v882
          %907 = vmatprep.subr.bf16.mxu0 0
          %908 = vmatpush1.bf16.msra.mxu0 0
          %909 = vmatprep.subr.bf16.mxu0 0
          %910 = vmatpush1.bf16.msra.mxu0 0
          %911 = vmatprep.subr.bf16.mxu0 0
          %912 = vmatpush1.bf16.msra.mxu0 0
          %913 = vmatprep.subr.bf16.mxu0 0
          %914 = vmatpush1.bf16.msra.mxu0 0
          %915 = vmatprep.subr.bf16.mxu0 0
          %916 = vmatpush1.bf16.msra.mxu0 0
          %917 = vmatprep.subr.bf16.mxu0 0
          %918 = vmatpush1.bf16.msra.mxu0 0
          %919 = vmatprep.subr.bf16.mxu0 0
          %920 = vmatpush1.bf16.msra.mxu0 0
          %921 = vmatprep.subr.bf16.mxu0 0
          %922 = vmatpush1.bf16.msra.mxu0 0
          %923 = vmatprep.mubr.bf16.mxu0 0
          %924 = vmatmul.mubr.bf16.gmra.mrb[0].mxu0 %v773
          %v925 = vpop.f32.mrb[0].mxu0
          %v926 = vadd.f32 %v841, %v925
          %v927 = vpop.f32.mrb[0].mxu0
          %v928 = vpop.f32.mrb[0].mxu0
          %v929 = vadd.f32 %v841, %v928
          %v930 = vpop.f32.mrb[0].mxu0
          %931 = vmatprep.mubr.bf16.mxu0 0
          %932 = vmatmul.mubr.bf16.gmra.mrb[0].mxu0 %v774
          %v933 = vpop.f32.mrb[0].mxu0
          %v934 = vadd.f32 %v841, %v933
          %v935 = vpop.f32.mrb[0].mxu0
          %v936 = vpop.f32.mrb[0].mxu0
          %v937 = vadd.f32 %v841, %v936
          %v938 = vpop.f32.mrb[0].mxu0
          %939 = vmatprep.mubr.bf16.mxu0 0
          %940 = vmatmul.mubr.bf16.gmra.mrb[0].mxu0 %v775
          %v941 = vpop.f32.mrb[0].mxu0
          %v942 = vadd.f32 %v841, %v941
          %v943 = vpop.f32.mrb[0].mxu0
          %v944 = vpop.f32.mrb[0].mxu0
          %v945 = vadd.f32 %v841, %v944
          %v946 = vpop.f32.mrb[0].mxu0
          %947 = vmatprep.mubr.bf16.mxu0 0
          %948 = vmatmul.mubr.bf16.gmra.mrb[0].mxu0 %v776
          %v949 = vpop.f32.mrb[0].mxu0
          %v950 = vadd.f32 %v841, %v949
          %v951 = vpop.f32.mrb[0].mxu0
          %v952 = vpop.f32.mrb[0].mxu0
          %v953 = vadd.f32 %v841, %v952
          %v954 = vpop.f32.mrb[0].mxu0
          %955 = vmatprep.mubr.bf16.mxu0 0
          %956 = vmatmul.mubr.bf16.gmra.mrb[0].mxu0 %v777
          %v957 = vpop.f32.mrb[0].mxu0
          %v958 = vadd.f32 %v841, %v957
          %v959 = vpop.f32.mrb[0].mxu0
          %v960 = vpop.f32.mrb[0].mxu0
          %v961 = vadd.f32 %v841, %v960
          %v962 = vpop.f32.mrb[0].mxu0
          %963 = vmatprep.mubr.bf16.mxu0 0
          %964 = vmatmul.mubr.bf16.gmra.mrb[0].mxu0 %v778
          %v965 = vpop.f32.mrb[0].mxu0
          %v966 = vadd.f32 %v841, %v965
          %v967 = vpop.f32.mrb[0].mxu0
          %v968 = vpop.f32.mrb[0].mxu0
          %v969 = vadd.f32 %v841, %v968
          %v970 = vpop.f32.mrb[0].mxu0
          %971 = vmatprep.mubr.bf16.mxu0 0
          %972 = vmatmul.mubr.bf16.gmra.mrb[0].mxu0 %v779
          %v973 = vpop.f32.mrb[0].mxu0
          %v974 = vadd.f32 %v841, %v973
          %v975 = vpop.f32.mrb[0].mxu0
          %v976 = vpop.f32.mrb[0].mxu0
          %v977 = vadd.f32 %v841, %v976
          %v978 = vpop.f32.mrb[0].mxu0
          %979 = vmatprep.mubr.bf16.mxu0 0
          %980 = vmatmul.mubr.bf16.gmra.mrb[0].mxu0 %v780
          %v981 = vpop.f32.mrb[0].mxu0
          %v982 = vadd.f32 %v841, %v981
          %v983 = vpop.f32.mrb[0].mxu0
          %v984 = vpop.f32.mrb[0].mxu0
          %v985 = vadd.f32 %v841, %v984
          %v986 = vpop.f32.mrb[0].mxu0
          %987 = vdwg.mxu0
          %988 = vst [vmem:[#allocation10] sm:$0xff] %v926
          %989 = vst [vmem:[#allocation10 + $0x8] sm:$0xff] %v929
          %990 = vst [vmem:[#allocation10 + $0x10] sm:$0xff] %v934
          %991 = vst [vmem:[#allocation10 + $0x18] sm:$0xff] %v937
          %992 = vst [vmem:[#allocation10 + $0x20] sm:$0xff] %v942
          %993 = vst [vmem:[#allocation10 + $0x28] sm:$0xff] %v945
          %994 = vst [vmem:[#allocation10 + $0x30] sm:$0xff] %v950
          %995 = vst [vmem:[#allocation10 + $0x38] sm:$0xff] %v953
          %996 = vst [vmem:[#allocation10 + $0x40] sm:$0xff] %v958
          %997 = vst [vmem:[#allocation10 + $0x48] sm:$0xff] %v961
          %998 = vst [vmem:[#allocation10 + $0x50] sm:$0xff] %v966
          %999 = vst [vmem:[#allocation10 + $0x58] sm:$0xff] %v969
          %1000 = vst [vmem:[#allocation10 + $0x60] sm:$0xff] %v974
          %1001 = vst [vmem:[#allocation10 + $0x68] sm:$0xff] %v977
          %1002 = vst [vmem:[#allocation10 + $0x70] sm:$0xff] %v982
          %1003 = vst [vmem:[#allocation10 + $0x78] sm:$0xff] %v985
        $region76: #{tpu_custom_call.1} parent=43 // pred_fallthru
          _
        // Predicated region
        $region77: #{tpu_custom_call.1} parent=43 // pred_check
          %p1004 = pneg %p191
        $region78: #{tpu_custom_call.1} parent=43 // pred_check_branch
          %1006 = sbr.rel (%p1004) target = $region80
        $region79: #{tpu_custom_call.1} parent=43 // pred_region
          %s1007 = smul.u32 16, %s25
          %s1009 = ssub.s32 2048, 2048
          %1010 = vsyncadd [#allocation5], %s1009
          %s1011 = smul.addr %s1007, 128
          %s1012 = scalar_lea.hbm %s6, %s1011
          %s1013 = sshll.u32 [#allocation10], 4
          %s1014 = int_to_ptr.vmem [resolvable:$true] %s1013
          %1019 = dma.vmem_to_hbm [thread:$0]  %s1014, 2048, %s1012, [#allocation5], 128, 128, 8
        $region80: #{tpu_custom_call.1} parent=43 // pred_fallthru
          _
        // Predicated region
        $region81: #{tpu_custom_call.1} parent=43 // pred_check
          %p1020 = pneg %p191
        $region82: #{tpu_custom_call.1} parent=43 // pred_check_branch
          %1022 = sbr.rel (%p1020) target = $region84
        $region83: #{tpu_custom_call.1} parent=43 // pred_region
          %1023 = dma.done [#allocation5], 2048
        $region84: #{tpu_custom_call.1} parent=43 // pred_fallthru
          _
      $region44: #{tpu_custom_call.1} parent=5 // pred_fallthru
        _
      %p1024 = scmp.le.s32.totalorder 2, %s15
      // Predicated region
      $region85: #{tpu_custom_call.1} parent=5 // pred_check
        %p1025 = pneg %p1024
      $region86: #{tpu_custom_call.1} parent=5 // pred_check_branch
        %1027 = sbr.rel (%p1025) target = $region88
      $region87: #{tpu_custom_call.1} parent=5 // pred_region
        %s1028 = ssub.s32 %s15, 2
      $region88: #{tpu_custom_call.1} parent=5 // pred_fallthru
        _
    $region6: #{tpu_custom_call.1} parent=1 // loop_footer
      %s19 = sadd.s32 1, %s15
    $region7: #{tpu_custom_call.1} parent=1 // loop_footer_branch
      %14 = sbr.rel target = $region3
    $region8: #{tpu_custom_call.1} parent=1 // loop_exit
      _
    %1029 = vsyncpa [#allocation4], 1
    %s1030 = scalar_lea.sflag [#allocation4], 1
    %1031 = vsyncpa %s1030, 1
    %1032 = vsyncpa [#allocation7], 1
    %1033 = vsyncpa [#allocation5], 1
    %s1034 = scalar_lea.sflag [#allocation5], 1
    %1035 = vsyncpa %s1034, 1

</llo_original>
